<compile_context>
chip_gen: v7x
topology: tpu7x:2x2x1
jax: 0.10.0
libtpu: 0.0.40
codegen_flags: <defaults>
</compile_context>

<pallas_src>
from functools import partial

import jax
import jax.numpy as jnp
from jax import lax
from jax.experimental import pallas as pl
from jax.experimental.pallas import tpu as pltpu


# --------------------------------------------------------------------------
# VMEM / tiling planning (generation-aware)
# --------------------------------------------------------------------------
def _round_up(x, m):
    return ((x + m - 1) // m) * m


def _vmem_capacity_bytes():
    """Physical VMEM capacity of the current chip; conservative fallback."""
    try:
        info = pltpu.get_tpu_info()
        cap = getattr(info, "vmem_capacity_bytes", None)
        if cap:
            return int(cap)
    except Exception:
        pass
    return 64 * 1024 * 1024  # v7x-safe fallback


def _plan_tiles(M, K, itemsize, k_splits, block_k=None):
    """Choose the K-tile width and a matching vmem_limit_bytes.

    Budget: ~half of physical VMEM, minus the resident (M, M) f32 Gram
    accumulator, goes to the double-buffered (M, tk) feature slab.
    """
    phys = _vmem_capacity_bytes()
    usable = phys // 2                     # headroom for compiler scratch etc.
    acc_bytes = 2 * M * M * 4              # (1, M, M) f32 accumulator (x2 bufs)
    overhead = 2 << 20
    feat_budget = usable - acc_bytes - overhead
    min_tile_bytes = 2 * M * 128 * itemsize

    if feat_budget < min_tile_bytes:
        # TODO(synk): tile the (M, M) output with an (i, j, k) grid for very large M.
        raise ValueError(
            f"StyleLoss Pallas kernel: Gram accumulator ({M}x{M} f32, "
            f"{acc_bytes} B double-buffered) plus a minimal (M, 128) feature "
            f"tile does not fit in VMEM (capacity {phys} B)."
        )

    if block_k is not None:
        if block_k <= 0 or block_k % 128 != 0:
            raise ValueError("block_k must be a positive multiple of 128")
        tk = int(block_k)
    else:
        cap = (feat_budget // (2 * M * itemsize)) // 128 * 128
        cap = max(128, int(cap))
        tk = int(min(cap, _round_up(K, 128)))

    est = 2 * M * tk * itemsize + acc_bytes + overhead + (4 << 20)
    vmem_limit = int(min(max(est, 16 << 20), phys))
    return tk, vmem_limit


# --------------------------------------------------------------------------
# Kernel: partial Gram accumulation over the streamed K axis
# --------------------------------------------------------------------------
def _gram_partial_kernel(feat_ref, g_ref):
    k = pl.program_id(1)

    @pl.when(k == 0)
    def _():
        g_ref[...] = jnp.zeros_like(g_ref)

    f = feat_ref[...]
    # F @ F.T without materializing a transpose: contract last dims of both.
    # (If the vex slot saturates in compute-bound configs, prefer bf16
    # streaming over any HBM-side pre-transpose.)
    g_ref[0] += lax.dot_general(
        f, f,
        dimension_numbers=(((1,), (1,)), ((), ())),
        preferred_element_type=jnp.float32,
    )


# --------------------------------------------------------------------------
# Wrappers
# --------------------------------------------------------------------------
def _pallas_gram_partials(feats, *, k_splits=1, block_k=None):
    """Returns unnormalized partial Grams, shape (k_splits, M, M), f32."""
    M, K = feats.shape
    itemsize = jnp.dtype(feats.dtype).itemsize
    k_splits = max(1, int(k_splits))
    tk, vmem_limit = _plan_tiles(M, K, itemsize, k_splits, block_k)

    # Zero-pad K up to a multiple of tk * k_splits (zero columns are no-ops
    # for F @ F.T), so tk stays near the budget for any K.
    k_pad = _round_up(K, tk * k_splits)
    if k_pad != K:
        feats = jnp.pad(feats, ((0, 0), (0, k_pad - K)))
    steps = k_pad // (tk * k_splits)

    cost = pl.CostEstimate(
        flops=2 * M * M * k_pad,
        bytes_accessed=M * k_pad * itemsize + k_splits * M * M * 4,
        transcendentals=0,
    )

    return pl.pallas_call(
        _gram_partial_kernel,
        out_shape=jax.ShapeDtypeStruct((k_splits, M, M), jnp.float32),
        grid=(k_splits, steps),
        in_specs=[
            pl.BlockSpec((M, tk), lambda c, k, _steps=steps: (0, c * _steps + k)),
        ],
        out_specs=pl.BlockSpec((1, M, M), lambda c, k: (c, 0, 0)),
        compiler_params=pltpu.CompilerParams(
            dimension_semantics=("parallel", "arbitrary"),
            vmem_limit_bytes=vmem_limit,
        ),
        cost_estimate=cost,
    )(feats)


def gram_matrix(x, *, stream_bf16=False, k_splits=1, block_k=None):
    """Pallas-backed Gram matrix matching the torch gram_matrix()."""
    a, b, c, d = x.shape
    feats = x.reshape(a * b, c * d)
    if stream_bf16 and feats.dtype == jnp.float32:
        # Opt-in: halve HBM traffic / MXU pushes; accumulation stays f32.
        feats = feats.astype(jnp.bfloat16)
    partials = _pallas_gram_partials(feats, k_splits=k_splits, block_k=block_k)
    # Sum partial Grams and normalize outside the kernel (trivial for XLA).
    return partials.sum(axis=0) * (1.0 / float(a * b * c * d))


class StyleLoss:
    """JAX/Pallas port of the PyTorch StyleLoss module (pass-through layer)."""

    def __init__(self, target_feature, *, stream_bf16=False, k_splits=1, block_k=None):
        self.stream_bf16 = stream_bf16
        self.k_splits = k_splits
        self.block_k = block_k
        # Target Gram computed once ("detached" constant), stored in f32.
        self.target = gram_matrix(
            target_feature, stream_bf16=stream_bf16,
            k_splits=k_splits, block_k=block_k,
        )
        self.loss = None
        self.G = None

    def __call__(self, x):
        G = gram_matrix(
            x, stream_bf16=self.stream_bf16,
            k_splits=self.k_splits, block_k=self.block_k,
        )
        self.G = G
        # MSE epilogue lives outside the kernel (frees the target's VMEM
        # footprint and keeps the hot loop pure matmul).
        self.loss = jnp.mean((G - self.target) ** 2)
        return x  # forward returns the input unchanged, like the nn.Module


# --------------------------------------------------------------------------
# Reference + self-test
# --------------------------------------------------------------------------
def _ref_gram(x):
    a, b, c, d = x.shape
    f = x.reshape(a * b, c * d).astype(jnp.float32)
    g = lax.dot_general(
        f, f, dimension_numbers=(((1,), (1,)), ((), ())),
        precision=lax.Precision.HIGHEST,
    )
    return g / float(a * b * c * d)


if __name__ == "__main__":
    key = jax.random.PRNGKey(0)
    k_tgt, k_in, k_tgt2, k_in2 = jax.random.split(key, 4)

    # --- Small NCHW feature maps, single-split path --------------------------
    target_feature = jax.random.normal(k_tgt, (2, 4, 16, 16), dtype=jnp.float32)
    x = jax.random.normal(k_in, (2, 4, 16, 16), dtype=jnp.float32)

    module = StyleLoss(target_feature)
    out = jax.block_until_ready(module(x))
    loss = jax.block_until_ready(module.loss)

    ref_target = _ref_gram(target_feature)
    ref_G = _ref_gram(x)
    ref_loss = jnp.mean((ref_G - ref_target) ** 2)

    assert out.shape == x.shape
    assert jnp.allclose(out, x)                                  # pass-through
    assert jnp.allclose(module.target, ref_target, atol=1e-4, rtol=1e-4)
    assert jnp.allclose(module.G, ref_G, atol=1e-4, rtol=1e-4)
    assert jnp.allclose(loss, ref_loss, atol=1e-5, rtol=1e-3)

    # --- Force K-tiled accumulation + two-way parallel K split ---------------
    target_feature2 = jax.random.normal(k_tgt2, (1, 8, 16, 32), dtype=jnp.float32)
    x2 = jax.random.normal(k_in2, (1, 8, 16, 32), dtype=jnp.float32)
    module2 = StyleLoss(target_feature2, block_k=128, k_splits=2)  # K=512 -> 2x2 grid
    out2 = jax.block_until_ready(module2(x2))
    loss2 = jax.block_until_ready(module2.loss)

    ref_G2 = _ref_gram(x2)
    ref_loss2 = jnp.mean((ref_G2 - _ref_gram(target_feature2)) ** 2)
    assert jnp.allclose(out2, x2)
    assert jnp.allclose(module2.G, ref_G2, atol=1e-4, rtol=1e-4)
    assert jnp.allclose(loss2, ref_loss2, atol=1e-5, rtol=1e-3)

    # --- Opt-in bf16 streaming path (looser tolerances) ----------------------
    module3 = StyleLoss(target_feature, stream_bf16=True)
    out3 = jax.block_until_ready(module3(x))
    loss3 = jax.block_until_ready(module3.loss)
    assert jnp.allclose(out3, x)
    assert jnp.allclose(module3.G, ref_G, atol=5e-3, rtol=2e-2)
    assert jnp.allclose(loss3, ref_loss, atol=1e-4, rtol=5e-2)

    # --- Non-multiple-of-128 K exercises zero-padding path -------------------
    x4 = jax.random.normal(k_in, (1, 3, 10, 10), dtype=jnp.float32)   # K=100
    tgt4 = jax.random.normal(k_tgt, (1, 3, 10, 10), dtype=jnp.float32)
    module4 = StyleLoss(tgt4)
    out4 = jax.block_until_ready(module4(x4))
    ref_G4 = _ref_gram(x4)
    ref_loss4 = jnp.mean((ref_G4 - _ref_gram(tgt4)) ** 2)
    assert jnp.allclose(module4.G, ref_G4, atol=1e-4, rtol=1e-4)
    assert jnp.allclose(module4.loss, ref_loss4, atol=1e-5, rtol=1e-3)

    print("KERNEL_OK")
</pallas_src>

<mosaic_0001>
module attributes {stable_mosaic.version = 11 : i64} {
  func.func @_gram_partial_kernel(%arg0: i32, %arg1: i32, %arg2: memref<8x256xf32, #tpu.memory_space<vmem>>, %arg3: memref<1x8x8xf32, #tpu.memory_space<vmem>>) attributes {dimension_semantics = [#tpu.dimension_semantics<parallel>, #tpu.dimension_semantics<arbitrary>], iteration_bounds = array<i64: 1, 1>, scalar_prefetch = 0 : i64, scratch_operands = 0 : i64, tpu.core_type = #tpu.core_type<tc>, window_params = [{transform_indices = @transform_0, window_bounds = array<i64: 8, 256>}, {transform_indices = @transform_1, window_bounds = array<i64: 1, 8, 8>}]} {
    %c0_i32 = arith.constant 0 : i32
    %0 = arith.cmpi eq, %arg1, %c0_i32 : i32
    %1 = arith.extui %0 : i1 to i32
    %c0_i32_0 = arith.constant 0 : i32
    %2 = arith.cmpi ne, %1, %c0_i32_0 : i32
    scf.if %2 {
      %cst_8 = arith.constant 0.000000e+00 : f32
      %11 = vector.broadcast %cst_8 : f32 to vector<1x8x8xf32>
      %c0_9 = arith.constant 0 : index
      %c0_10 = arith.constant 0 : index
      %c0_11 = arith.constant 0 : index
      %12 = vector.load %arg3[%c0_9, %c0_10, %c0_11] : memref<1x8x8xf32, #tpu.memory_space<vmem>>, vector<1x8x8xf32>
      tpu.vector_store %arg3[%c0_9, %c0_10, %c0_11], %11 {strides = array<i32>} : memref<1x8x8xf32, #tpu.memory_space<vmem>>, vector<1x8x8xf32>,
    } else {
    }
    %c0 = arith.constant 0 : index
    %c0_1 = arith.constant 0 : index
    %3 = vector.load %arg2[%c0, %c0_1] : memref<8x256xf32, #tpu.memory_space<vmem>>, vector<8x256xf32>
    %c0_2 = arith.constant 0 : index
    %c0_3 = arith.constant 0 : index
    %c0_4 = arith.constant 0 : index
    %4 = vector.load %arg3[%c0_2, %c0_3, %c0_4] : memref<1x8x8xf32, #tpu.memory_space<vmem>>, vector<1x8x8xf32>
    %5 = vector.shape_cast %4 : vector<1x8x8xf32> to vector<8x8xf32>
    %cst = arith.constant dense<0.000000e+00> : vector<8x8xf32>
    %6 = tpu.matmul %3, %3, %cst {dimension_numbers = #tpu.dot_dimension_numbers<[1], [1], [0], [0], [0, 0, 1, 0], [], []>} : vector<8x256xf32>, vector<8x256xf32>, vector<8x8xf32> -> vector<8x8xf32>
    %7 = arith.addf %5, %6 : vector<8x8xf32>
    %c0_5 = arith.constant 0 : index
    %c0_6 = arith.constant 0 : index
    %c0_7 = arith.constant 0 : index
    %8 = vector.load %arg3[%c0_5, %c0_6, %c0_7] : memref<1x8x8xf32, #tpu.memory_space<vmem>>, vector<1x8x8xf32>
    %9 = vector.shape_cast %8 : vector<1x8x8xf32> to vector<8x8xf32>
    %10 = vector.shape_cast %7 : vector<8x8xf32> to vector<1x8x8xf32>
    tpu.vector_store %arg3[%c0_5, %c0_6, %c0_7], %10 {strides = array<i32>} : memref<1x8x8xf32, #tpu.memory_space<vmem>>, vector<1x8x8xf32>,
    return
  }
  func.func @transform_0(%arg0: i32, %arg1: i32) -> (i32, i32) {
    %c1_i32 = arith.constant 1 : i32
    %0 = arith.muli %arg0, %c1_i32 : i32
    %1 = arith.addi %0, %arg1 : i32
    %c0_i32 = arith.constant 0 : i32
    %c0_i32_0 = arith.constant 0 : i32
    return %c0_i32, %1 : i32, i32
  }
  func.func @transform_1(%arg0: i32, %arg1: i32) -> (i32, i32, i32) {
    %c0_i32 = arith.constant 0 : i32
    %c0_i32_0 = arith.constant 0 : i32
    %c0_i32_1 = arith.constant 0 : i32
    return %arg0, %c0_i32, %c0_i32_0 : i32, i32, i32
  }
}

</mosaic_0001>

<llo_original>
// kernel: tpu_custom_call.1
$region0: #{tpu_custom_call.1}
  #allocation0 [shape = 'u32[]', space=smem, size = 0x4, offset = 0x4, fixed_abs, tag = 'smem constant byte address 0x4 - core index']
  #allocation1 [shape = 'u32[144,128]{1,0:T(1,128)}', space=vmem, size = 0x12000, scoped, tag = 'internal scratch']
  %s0 = inlined_call_operand.hbm [shape: f32[8,256], index: 0, kind: input, shape index: {}]
  %s1 = inlined_call_operand.hbm [shape: f32[1,8,8], index: 1, kind: output, shape index: {}]
  %s2 = sld [smem:[#allocation0]]
  $region22: #{tpu_custom_call.1} parent=0
    _
  %s4 = ssub.s32 1, %s2
  %s5 = scalar_select 0, %s4, %s2
  $region1: #{tpu_custom_call.1} parent=0
    #allocation2 [shape = 'u8[8192]{0}', space=vmem, size = 0x2000, scoped, tag = 'input window, operand 0, single buffered']
    #allocation3 [shape = 's32[1]{0}', space=sflag, size = 0x4, scoped, tag = 'scoped memory for tpu_custom_call.1']
    #allocation4 [shape = 's32[1]{0}', space=sflag, size = 0x4, scoped, tag = 'scoped memory for tpu_custom_call.1']
    #allocation5 [shape = 'u8[4096]{0}', space=vmem, size = 0x1000, scoped, tag = 'output window, operand 0, single buffered']
    %6 = vsyncpa [#allocation3], 0
    %7 = vsyncpa [#allocation4], 0
    // Predicated region
    $region2: #{tpu_custom_call.1} parent=1 // pred_check
      _
    $region3: #{tpu_custom_call.1} parent=1 // pred_check_branch
      %9 = sbr.rel (0) target = $region5
    $region4: #{tpu_custom_call.1} parent=1 // pred_region
      %s10 = sadd.s32 0, 0
      %s11 = smul.u32 2, %s10
      %s13 = ssub.s32 256, 256
      %14 = vsyncadd [#allocation3], %s13
      %s15 = smul.addr %s11, 128
      %s16 = scalar_lea.hbm %s0, %s15
      %s18 = sshll.u32 [#allocation2], 4
      %s19 = int_to_ptr.vmem [resolvable:$true] %s18
      %21 = dma.hbm_to_vmem [thread:$0]  %s16, 256, %s19, [#allocation3]
    $region5: #{tpu_custom_call.1} parent=1 // pred_fallthru
      _
    // Predicated region
    $region6: #{tpu_custom_call.1} parent=1 // pred_check
      _
    $region7: #{tpu_custom_call.1} parent=1 // pred_check_branch
      %23 = sbr.rel (0) target = $region9
    $region8: #{tpu_custom_call.1} parent=1 // pred_region
      %24 = dma.done [#allocation3], 256
    $region9: #{tpu_custom_call.1} parent=1 // pred_fallthru
      _
    %s25 = sadd.s32 0, 0
    %s26 = smul.u32 2, %s25
    %p27 = scmp.eq.s32.totalorder 0, 0
    // Predicated region
    $region10: #{tpu_custom_call.1} parent=1 // pred_check
      %p28 = pneg %p27
    $region11: #{tpu_custom_call.1} parent=1 // pred_check_branch
      %30 = sbr.rel (%p28) target = $region13
    $region12: #{tpu_custom_call.1} parent=1 // pred_region
      %vm31 = vcmask 64512
      %32 = vst.msk [vmem:[#allocation5] sm:$0xff] %vm31, 0.0
    $region13: #{tpu_custom_call.1} parent=1 // pred_fallthru
      _
    %v33 = vld [vmem:[#allocation2] sm:$0xff]
    %v34 = vld [vmem:[#allocation2 + $0x8] sm:$0xff]
    %v35 = vld [vmem:[#allocation5] sm:$0xff]
    %36 = vmatprep.subr.mxu0 %v34
    %37 = vmatpush1.xpose.msra.mxu0 %v33
    %38 = vmatprep.subr.mxu0 0.0
    %39 = vmatpush1.xpose.msra.mxu0 0.0
    %40 = vmatprep.subr.mxu0 0.0
    %41 = vmatpush1.xpose.msra.mxu0 0.0
    %42 = vmatprep.subr.mxu0 0.0
    %43 = vmatpush1.xpose.msra.mxu0 0.0
    %44 = vmatprep.subr.mxu0 0.0
    %45 = vmatpush1.xpose.msra.mxu0 0.0
    %46 = vmatprep.subr.mxu0 0.0
    %47 = vmatpush1.xpose.msra.mxu0 0.0
    %48 = vmatprep.subr.mxu0 0.0
    %49 = vmatpush1.xpose.msra.mxu0 0.0
    %50 = vmatprep.subr.mxu0 0.0
    %51 = vmatpush1.xpose.msra.mxu0 0.0
    %52 = vmatprep.subr.mxu0 0.0
    %53 = vmatpush1.xpose.msra.mxu0 0.0
    %54 = vmatprep.subr.mxu0 0.0
    %55 = vmatpush1.xpose.msra.mxu0 0.0
    %56 = vmatprep.subr.mxu0 0.0
    %57 = vmatpush1.xpose.msra.mxu0 0.0
    %58 = vmatprep.subr.mxu0 0.0
    %59 = vmatpush1.xpose.msra.mxu0 0.0
    %60 = vmatprep.subr.mxu0 0.0
    %61 = vmatpush1.xpose.msra.mxu0 0.0
    %62 = vmatprep.subr.mxu0 0.0
    %63 = vmatpush1.xpose.msra.mxu0 0.0
    %64 = vmatprep.subr.mxu0 0.0
    %65 = vmatpush1.xpose.msra.mxu0 0.0
    %66 = vmatprep.subr.mxu0 0.0
    %67 = vmatpush1.xpose.msra.mxu0 0.0
    %68 = vmatprep.subr.mxu0 0.0
    %69 = vmatpush1.xpose.msra.mxu0 0.0
    %70 = vmatprep.subr.mxu0 0.0
    %71 = vmatpush1.xpose.msra.mxu0 0.0
    %72 = vmatprep.subr.mxu0 0.0
    %73 = vmatpush1.xpose.msra.mxu0 0.0
    %74 = vmatprep.subr.mxu0 0.0
    %75 = vmatpush1.xpose.msra.mxu0 0.0
    %76 = vmatprep.subr.mxu0 0.0
    %77 = vmatpush1.xpose.msra.mxu0 0.0
    %78 = vmatprep.subr.mxu0 0.0
    %79 = vmatpush1.xpose.msra.mxu0 0.0
    %80 = vmatprep.subr.mxu0 0.0
    %81 = vmatpush1.xpose.msra.mxu0 0.0
    %82 = vmatprep.subr.mxu0 0.0
    %83 = vmatpush1.xpose.msra.mxu0 0.0
    %84 = vmatprep.subr.mxu0 0.0
    %85 = vmatpush1.xpose.msra.mxu0 0.0
    %86 = vmatprep.subr.mxu0 0.0
    %87 = vmatpush1.xpose.msra.mxu0 0.0
    %88 = vmatprep.subr.mxu0 0.0
    %89 = vmatpush1.xpose.msra.mxu0 0.0
    %90 = vmatprep.subr.mxu0 0.0
    %91 = vmatpush1.xpose.msra.mxu0 0.0
    %92 = vmatprep.subr.mxu0 0.0
    %93 = vmatpush1.xpose.msra.mxu0 0.0
    %94 = vmatprep.subr.mxu0 0.0
    %95 = vmatpush1.xpose.msra.mxu0 0.0
    %96 = vmatprep.subr.mxu0 0.0
    %97 = vmatpush1.xpose.msra.mxu0 0.0
    %98 = vmatprep.subr.mxu0 0.0
    %99 = vmatpush1.xpose.msra.mxu0 0.0
    %100 = vmatprep.mubr.f32.mxu0 %v34
    %101 = vmatmul.mubr.f32.gmra.mrb[0].mxu0 %v33
    %v102 = vpop.f32.mrb[0].mxu0
    %v103 = vadd.f32 0.0, %v102
    %v104 = vpop.f32.mrb[0].mxu0
    %105 = vdwg.mxu0
    %v106 = vadd.f32 %v35, %v103
    %vm107 = vcmask 64512
    %108 = vst.msk [vmem:[#allocation5] sm:$0xff] %vm107, %v106
    // Predicated region
    $region14: #{tpu_custom_call.1} parent=1 // pred_check
      _
    $region15: #{tpu_custom_call.1} parent=1 // pred_check_branch
      %110 = sbr.rel (0) target = $region17
    $region16: #{tpu_custom_call.1} parent=1 // pred_region
      %s112 = ssub.s32 128, 128
      %113 = vsyncadd [#allocation4], %s112
      %s115 = sshll.u32 [#allocation5], 4
      %s116 = int_to_ptr.vmem [resolvable:$true] %s115
      %118 = dma.vmem_to_hbm [thread:$0]  %s116, 128, %s1, [#allocation4]
    $region17: #{tpu_custom_call.1} parent=1 // pred_fallthru
      _
    // Predicated region
    $region18: #{tpu_custom_call.1} parent=1 // pred_check
      _
    $region19: #{tpu_custom_call.1} parent=1 // pred_check_branch
      %120 = sbr.rel (0) target = $region21
    $region20: #{tpu_custom_call.1} parent=1 // pred_region
      %121 = dma.done [#allocation4], 128
    $region21: #{tpu_custom_call.1} parent=1 // pred_fallthru
      _
    %122 = vsyncpa [#allocation3], 1
    %123 = vsyncpa [#allocation4], 1

</llo_original>
